<compile_context>
chip_gen: v6e
topology: v6e:2x2x1
jax: 0.10.0
libtpu: 0.0.40
codegen_flags: <defaults>
</compile_context>

<pallas_src>
import jax
import jax.numpy as jnp
from jax.experimental import pallas as pl
from jax.experimental.pallas import tpu as pltpu

SMOOTH = 1e-5
LANE = 128          # vreg lane width
SUBLANE = 8         # vreg sublane count (f32)
TR_TARGET = 8192    # target sublane rows per tile (4 MiB f32 per input tile)


def _round_up(n, m):
    return ((n + m - 1) // m) * m


def _edice_partials_kernel(x_ref, t_ref, o_ref):
    """Grid = (C, B, NT).

    x_ref / t_ref : (1, TR, 128) tile of the (b, c) plane (native dtype).
    o_ref         : (1, 1, 3, 8, 128) per-(c, b) partial-sum block. Its index_map
                    is constant along the t (reduction) axis, so it stays resident
                    in VMEM and is used directly as the accumulator.
    """
    t = pl.program_id(2)

    @pl.when(t == 0)
    def _():
        o_ref[...] = jnp.zeros_like(o_ref)

    x = x_ref[0].astype(jnp.float32)      # (TR, 128), cast in-register
    tgt = t_ref[0].astype(jnp.float32)    # (TR, 128)
    p = jax.nn.sigmoid(x)                 # do_sigmoid=True (EUP)

    tr = x.shape[0]

    def fold(v):
        # vreg-preserving grouping (TR,128) -> (TR//8, 8, 128); summing axis 0 is a
        # pure VALU vreg-add chain, no XLU sublane fold per tile.
        return jnp.sum(v.reshape(tr // SUBLANE, SUBLANE, LANE), axis=0)

    o_ref[0, 0, 0] += fold(p * tgt)       # intersection partial
    o_ref[0, 0, 1] += fold(p * p)         # sum(sigmoid(x)^2) partial
    o_ref[0, 0, 2] += fold(tgt * tgt)     # sum(target^2) partial


def edice_loss_val(inputs, target, *, tr_target=TR_TARGET):
    """EDiceLoss_Val forward (do_sigmoid=True, metric_mode=False).

    inputs, target: (B, C, H, W).  Keep them in their native dtype at the call
    site (bf16 halves HBM traffic for this bandwidth-bound kernel — do NOT insert
    a separate cast right before the call); the kernel casts to f32 in-register.
    Returns a scalar f32 loss.
    """
    B, C, H, W = inputs.shape
    assert target.shape == inputs.shape
    HW = H * W

    rows = pl.cdiv(HW, LANE)                         # 128-lane rows per (b, c) plane
    nt = pl.cdiv(rows, tr_target)                    # tiles per plane
    tr = _round_up(pl.cdiv(rows, nt), SUBLANE)       # balanced rows/tile, multiple of 8
    rows_pad = nt * tr
    hw_pad = rows_pad * LANE
    pad_elems = hw_pad - HW                          # zero-padded tail per plane

    def to_tiles(a):
        # NCHW is contiguous -> reshape is free.  Padding uses exact zeros; the
        # analytic sum(p^2) correction below relies on that invariant.
        a2 = a.reshape(B * C, HW)
        if pad_elems:
            # TODO(synk): a ragged last tile (pl.BoundedSlice / masked tail read)
            # would avoid this extra HBM pass over both arrays when HW is unaligned.
            a2 = jnp.pad(a2, ((0, 0), (0, pad_elems)))
        return a2.reshape(B * C, rows_pad, LANE)

    x3 = to_tiles(inputs)   # native dtype streamed to the kernel
    t3 = to_tiles(target)

    row_map = lambda c, b, t: (b * C + c, t, 0)      # pick the (b, c) plane via index_map

    partials = pl.pallas_call(
        _edice_partials_kernel,
        out_shape=jax.ShapeDtypeStruct((C, B, 3, SUBLANE, LANE), jnp.float32),
        grid_spec=pltpu.PrefetchScalarGridSpec(
            num_scalar_prefetch=0,
            grid=(C, B, nt),
            in_specs=[
                pl.BlockSpec((1, tr, LANE), row_map),
                pl.BlockSpec((1, tr, LANE), row_map),
            ],
            out_specs=pl.BlockSpec(
                (1, 1, 3, SUBLANE, LANE), lambda c, b, t: (c, b, 0, 0, 0)
            ),
        ),
        compiler_params=pltpu.CompilerParams(
            # No cross-(c,b) carry -> c and b shard across TensorCores (v7x); the
            # reduction axis t stays "arbitrary".
            dimension_semantics=("parallel", "parallel", "arbitrary"),
            vmem_limit_bytes=32 * 1024 * 1024,
        ),
    )(x3, t3)

    # Tiny finalize in plain JAX: fold sublanes/lanes, correct padding bias, dice.
    sums = jnp.sum(partials, axis=(-2, -1))          # (C, B, 3)
    inter = jnp.sum(sums[..., 0], axis=1)            # (C,)
    # Padded targets are exact zeros, so inter and t^2 are unbiased; each padded
    # element adds sigmoid(0)^2 = 0.25 to sum(p^2) -> subtract analytically.
    xsq = jnp.sum(sums[..., 1], axis=1) - 0.25 * float(pad_elems) * B
    tsq = jnp.sum(sums[..., 2], axis=1)
    dice = (2.0 * inter + SMOOTH) / (xsq + tsq + SMOOTH)
    return jnp.mean(1.0 - dice)


def _edice_loss_ref(inputs, target):
    """Pure-JAX reference mirroring the PyTorch forward exactly."""
    B, C, H, W = inputs.shape
    total = 0.0
    for i in range(C):
        x = jax.nn.sigmoid(inputs[:, i].astype(jnp.float32))
        t = target[:, i].astype(jnp.float32)
        inter = jnp.sum(x * t)
        d = (2.0 * inter + SMOOTH) / (jnp.sum(x * x) + jnp.sum(t * t) + SMOOTH)
        total = total + (1.0 - d)
    return total / C


if __name__ == "__main__":
    key = jax.random.PRNGKey(0)

    def make(shape, dtype, k):
        k1, k2 = jax.random.split(k)
        x = jax.random.normal(k1, shape, dtype=jnp.float32).astype(dtype)
        t = (jax.random.uniform(k2, shape) > 0.5).astype(dtype)
        return x, t

    # (shape, dtype, tr_target) — small tr_target values force the multi-tile
    # reduction / accumulator-reset path at small test shapes.
    cases = [
        ((2, 3, 16, 16), jnp.float32, TR_TARGET),  # single tile, padded lanes (HW % 128 != 0 after rounding to 8 rows)
        ((2, 3, 40, 33), jnp.float32, 8),          # HW % 128 != 0, multi-tile, padded tail
        ((2, 3, 64, 64), jnp.bfloat16, 16),        # aligned (no pad), multi-tile, bf16 streaming
    ]

    for idx, (shape, dtype, trt) in enumerate(cases):
        key, sub = jax.random.split(key)
        x, t = make(shape, dtype, sub)
        loss = edice_loss_val(x, t, tr_target=trt)
        jax.block_until_ready(loss)
        ref = _edice_loss_ref(x, t)
        assert jnp.allclose(loss, ref, rtol=2e-5, atol=1e-5), (idx, loss, ref)

    print("KERNEL_OK")
</pallas_src>

<mosaic_0001>
module attributes {stable_mosaic.version = 11 : i64} {
  func.func @_edice_partials_kernel(%arg0: i32, %arg1: i32, %arg2: i32, %arg3: memref<1x8x128xf32, #tpu.memory_space<vmem>>, %arg4: memref<1x8x128xf32, #tpu.memory_space<vmem>>, %arg5: memref<1x1x3x8x128xf32, #tpu.memory_space<vmem>>) attributes {dimension_semantics = [#tpu.dimension_semantics<parallel>, #tpu.dimension_semantics<parallel>, #tpu.dimension_semantics<arbitrary>], iteration_bounds = array<i64: 3, 2, 1>, scalar_prefetch = 0 : i64, scratch_operands = 0 : i64, tpu.core_type = #tpu.core_type<tc>, window_params = [{transform_indices = @transform_0, window_bounds = array<i64: 1, 8, 128>}, {transform_indices = @transform_1, window_bounds = array<i64: 1, 8, 128>}, {transform_indices = @transform_2, window_bounds = array<i64: 1, 1, 3, 8, 128>}]} {
    %c0_i32 = arith.constant 0 : i32
    %0 = arith.cmpi eq, %arg2, %c0_i32 : i32
    %1 = arith.extui %0 : i1 to i32
    %c0_i32_0 = arith.constant 0 : i32
    %2 = arith.cmpi ne, %1, %c0_i32_0 : i32
    scf.if %2 {
      %cst_37 = arith.constant 0.000000e+00 : f32
      %39 = vector.broadcast %cst_37 : f32 to vector<1x1x3x8x128xf32>
      %c0_38 = arith.constant 0 : index
      %c0_39 = arith.constant 0 : index
      %c0_40 = arith.constant 0 : index
      %c0_41 = arith.constant 0 : index
      %c0_42 = arith.constant 0 : index
      %40 = vector.load %arg5[%c0_38, %c0_39, %c0_40, %c0_41, %c0_42] : memref<1x1x3x8x128xf32, #tpu.memory_space<vmem>>, vector<1x1x3x8x128xf32>
      tpu.vector_store %arg5[%c0_38, %c0_39, %c0_40, %c0_41, %c0_42], %39 {strides = array<i32>} : memref<1x1x3x8x128xf32, #tpu.memory_space<vmem>>, vector<1x1x3x8x128xf32>,
    } else {
    }
    %c0 = arith.constant 0 : index
    %c0_1 = arith.constant 0 : index
    %c0_2 = arith.constant 0 : index
    %3 = vector.load %arg3[%c0, %c0_1, %c0_2] : memref<1x8x128xf32, #tpu.memory_space<vmem>>, vector<1x8x128xf32>
    %4 = vector.shape_cast %3 : vector<1x8x128xf32> to vector<8x128xf32>
    %c0_3 = arith.constant 0 : index
    %c0_4 = arith.constant 0 : index
    %c0_5 = arith.constant 0 : index
    %5 = vector.load %arg4[%c0_3, %c0_4, %c0_5] : memref<1x8x128xf32, #tpu.memory_space<vmem>>, vector<1x8x128xf32>
    %6 = vector.shape_cast %5 : vector<1x8x128xf32> to vector<8x128xf32>
    %7 = arith.negf %4 : vector<8x128xf32>
    %8 = math.exp %7 : vector<8x128xf32>
    %cst = arith.constant 1.000000e+00 : f32
    %9 = vector.broadcast %cst : f32 to vector<8x128xf32>
    %10 = arith.addf %9, %8 : vector<8x128xf32>
    %11 = arith.divf %9, %10 : vector<8x128xf32>
    %c0_6 = arith.constant 0 : index
    %c0_7 = arith.constant 0 : index
    %c0_8 = arith.constant 0 : index
    %c0_9 = arith.constant 0 : index
    %c0_10 = arith.constant 0 : index
    %12 = vector.load %arg5[%c0_6, %c0_7, %c0_8, %c0_9, %c0_10] : memref<1x1x3x8x128xf32, #tpu.memory_space<vmem>>, vector<1x1x1x8x128xf32>
    %13 = vector.shape_cast %12 : vector<1x1x1x8x128xf32> to vector<8x128xf32>
    %14 = arith.mulf %11, %6 : vector<8x128xf32>
    %15 = vector.shape_cast %14 : vector<8x128xf32> to vector<1x8x128xf32>
    %cst_11 = arith.constant dense<0.000000e+00> : vector<8x128xf32>
    %16 = vector.multi_reduction <add>, %15, %cst_11 [0] : vector<1x8x128xf32> to vector<8x128xf32>
    %17 = arith.addf %13, %16 : vector<8x128xf32>
    %c0_12 = arith.constant 0 : index
    %c0_13 = arith.constant 0 : index
    %c0_14 = arith.constant 0 : index
    %c0_15 = arith.constant 0 : index
    %c0_16 = arith.constant 0 : index
    %18 = vector.load %arg5[%c0_12, %c0_13, %c0_14, %c0_15, %c0_16] : memref<1x1x3x8x128xf32, #tpu.memory_space<vmem>>, vector<1x1x1x8x128xf32>
    %19 = vector.shape_cast %18 : vector<1x1x1x8x128xf32> to vector<8x128xf32>
    %20 = vector.shape_cast %17 : vector<8x128xf32> to vector<1x1x1x8x128xf32>
    tpu.vector_store %arg5[%c0_12, %c0_13, %c0_14, %c0_15, %c0_16], %20 {strides = array<i32>} : memref<1x1x3x8x128xf32, #tpu.memory_space<vmem>>, vector<1x1x1x8x128xf32>,
    %c0_17 = arith.constant 0 : index
    %c0_18 = arith.constant 0 : index
    %c1 = arith.constant 1 : index
    %c0_19 = arith.constant 0 : index
    %c0_20 = arith.constant 0 : index
    %21 = vector.load %arg5[%c0_17, %c0_18, %c1, %c0_19, %c0_20] : memref<1x1x3x8x128xf32, #tpu.memory_space<vmem>>, vector<1x1x1x8x128xf32>
    %22 = vector.shape_cast %21 : vector<1x1x1x8x128xf32> to vector<8x128xf32>
    %23 = arith.mulf %11, %11 : vector<8x128xf32>
    %24 = vector.shape_cast %23 : vector<8x128xf32> to vector<1x8x128xf32>
    %cst_21 = arith.constant dense<0.000000e+00> : vector<8x128xf32>
    %25 = vector.multi_reduction <add>, %24, %cst_21 [0] : vector<1x8x128xf32> to vector<8x128xf32>
    %26 = arith.addf %22, %25 : vector<8x128xf32>
    %c0_22 = arith.constant 0 : index
    %c0_23 = arith.constant 0 : index
    %c1_24 = arith.constant 1 : index
    %c0_25 = arith.constant 0 : index
    %c0_26 = arith.constant 0 : index
    %27 = vector.load %arg5[%c0_22, %c0_23, %c1_24, %c0_25, %c0_26] : memref<1x1x3x8x128xf32, #tpu.memory_space<vmem>>, vector<1x1x1x8x128xf32>
    %28 = vector.shape_cast %27 : vector<1x1x1x8x128xf32> to vector<8x128xf32>
    %29 = vector.shape_cast %26 : vector<8x128xf32> to vector<1x1x1x8x128xf32>
    tpu.vector_store %arg5[%c0_22, %c0_23, %c1_24, %c0_25, %c0_26], %29 {strides = array<i32>} : memref<1x1x3x8x128xf32, #tpu.memory_space<vmem>>, vector<1x1x1x8x128xf32>,
    %c0_27 = arith.constant 0 : index
    %c0_28 = arith.constant 0 : index
    %c2 = arith.constant 2 : index
    %c0_29 = arith.constant 0 : index
    %c0_30 = arith.constant 0 : index
    %30 = vector.load %arg5[%c0_27, %c0_28, %c2, %c0_29, %c0_30] : memref<1x1x3x8x128xf32, #tpu.memory_space<vmem>>, vector<1x1x1x8x128xf32>
    %31 = vector.shape_cast %30 : vector<1x1x1x8x128xf32> to vector<8x128xf32>
    %32 = arith.mulf %6, %6 : vector<8x128xf32>
    %33 = vector.shape_cast %32 : vector<8x128xf32> to vector<1x8x128xf32>
    %cst_31 = arith.constant dense<0.000000e+00> : vector<8x128xf32>
    %34 = vector.multi_reduction <add>, %33, %cst_31 [0] : vector<1x8x128xf32> to vector<8x128xf32>
    %35 = arith.addf %31, %34 : vector<8x128xf32>
    %c0_32 = arith.constant 0 : index
    %c0_33 = arith.constant 0 : index
    %c2_34 = arith.constant 2 : index
    %c0_35 = arith.constant 0 : index
    %c0_36 = arith.constant 0 : index
    %36 = vector.load %arg5[%c0_32, %c0_33, %c2_34, %c0_35, %c0_36] : memref<1x1x3x8x128xf32, #tpu.memory_space<vmem>>, vector<1x1x1x8x128xf32>
    %37 = vector.shape_cast %36 : vector<1x1x1x8x128xf32> to vector<8x128xf32>
    %38 = vector.shape_cast %35 : vector<8x128xf32> to vector<1x1x1x8x128xf32>
    tpu.vector_store %arg5[%c0_32, %c0_33, %c2_34, %c0_35, %c0_36], %38 {strides = array<i32>} : memref<1x1x3x8x128xf32, #tpu.memory_space<vmem>>, vector<1x1x1x8x128xf32>,
    return
  }
  func.func @transform_0(%arg0: i32, %arg1: i32, %arg2: i32) -> (i32, i32, i32) {
    %c3_i32 = arith.constant 3 : i32
    %0 = arith.muli %arg1, %c3_i32 : i32
    %1 = arith.addi %0, %arg0 : i32
    %c0_i32 = arith.constant 0 : i32
    %c0_i32_0 = arith.constant 0 : i32
    return %1, %arg2, %c0_i32 : i32, i32, i32
  }
  func.func @transform_1(%arg0: i32, %arg1: i32, %arg2: i32) -> (i32, i32, i32) {
    %c3_i32 = arith.constant 3 : i32
    %0 = arith.muli %arg1, %c3_i32 : i32
    %1 = arith.addi %0, %arg0 : i32
    %c0_i32 = arith.constant 0 : i32
    %c0_i32_0 = arith.constant 0 : i32
    return %1, %arg2, %c0_i32 : i32, i32, i32
  }
  func.func @transform_2(%arg0: i32, %arg1: i32, %arg2: i32) -> (i32, i32, i32, i32, i32) {
    %c0_i32 = arith.constant 0 : i32
    %c0_i32_0 = arith.constant 0 : i32
    %c0_i32_1 = arith.constant 0 : i32
    %c0_i32_2 = arith.constant 0 : i32
    return %arg0, %arg1, %c0_i32, %c0_i32_0, %c0_i32_1 : i32, i32, i32, i32, i32
  }
}

</mosaic_0001>

<llo_original>
// kernel: tpu_custom_call.1
$region0: #{tpu_custom_call.1}
  #allocation0 [shape = 'u32[]', space=smem, size = 0x4, offset = 0x4, fixed_abs, tag = 'smem constant byte address 0x4 - core index']
  #allocation1 [shape = 'u32[144,128]{1,0:T(1,128)}', space=vmem, size = 0x12000, scoped, tag = 'internal scratch']
  %s0 = inlined_call_operand.hbm [shape: f32[6,8,128], index: 0, kind: input, shape index: {}]
  %s1 = inlined_call_operand.hbm [shape: f32[6,8,128], index: 1, kind: input, shape index: {}]
  %s2 = inlined_call_operand.hbm [shape: f32[3,2,3,8,128], index: 2, kind: output, shape index: {}]
  %s3 = sld [smem:[#allocation0]]
  $region53: #{tpu_custom_call.1} parent=0
    _
  %s5 = ssub.s32 1, %s3
  %s6 = scalar_select 0, %s5, %s3
  $region1: #{tpu_custom_call.1} parent=0
    #allocation2 [shape = 'u8[8192]{0}', space=vmem, size = 0x2000, scoped, tag = 'input window, operand 0']
    #allocation3 [shape = 's32[2]{0}', space=sflag, size = 0x8, scoped, tag = 'scoped memory for tpu_custom_call.1']
    #allocation4 [shape = 's32[2]{0}', space=sflag, size = 0x8, scoped, tag = 'scoped memory for tpu_custom_call.1']
    #allocation5 [shape = 'u8[8192]{0}', space=vmem, size = 0x2000, scoped, tag = 'input window, operand 1']
    #allocation6 [shape = 's32[2]{0}', space=sflag, size = 0x8, scoped, tag = 'scoped memory for tpu_custom_call.1']
    #allocation7 [shape = 'u8[24576]{0}', space=vmem, size = 0x6000, scoped, tag = 'output window, operand 0']
    %7 = vsyncpa [#allocation3], 0
    %s8 = scalar_lea.sflag [#allocation3], 1
    %9 = vsyncpa %s8, 0
    %10 = vsyncpa [#allocation6], 0
    %s11 = scalar_lea.sflag [#allocation6], 1
    %12 = vsyncpa %s11, 0
    %13 = vsyncpa [#allocation4], 0
    %s14 = scalar_lea.sflag [#allocation4], 1
    %15 = vsyncpa %s14, 0
    loop: start=0, step=1, limit=8
    $region2: #{tpu_custom_call.1} parent=1 // loop_pre_header
      _
    $region3: #{tpu_custom_call.1} parent=1 // loop_header
      %s17 = sphi 0, %s21
      %p18 = scmp.ge.s32.totalorder %s17, 8
      %s24 = sphi 0, %s43
      %s25 = sphi 0, %s39
      %s26 = sphi 0, %s35
      %s27 = sphi 0, %s24
      %s28 = sphi 0, %s25
      %s29 = sphi 0, %s26
      %s30 = sphi 0, %s27
      %s31 = sphi 0, %s28
      %s32 = sphi 0, %s29
      %s52 = sphi 0, %s54
      %s55 = sphi 0, %s52
      %s56 = sphi 0, %s55
      %s72 = sphi 0, %s56
      %s84 = sphi 0, %s86
      %s87 = sphi 0, %s84
      %s88 = sphi 0, %s87
      %s104 = sphi 0, %s88
      %s112 = sphi 0, %s114
      %s115 = sphi 0, %s112
      %s116 = sphi 0, %s115
      %s132 = sphi 0, %s116
    $region4: #{tpu_custom_call.1} parent=1 // loop_header_branch
      %20 = sbr.rel (%p18) target = $region8
    $region5: #{tpu_custom_call.1} parent=1 // loop_body
      %s22 = ssub.s32 %s17, 1
      %s23 = ssub.s32 %s17, 2
      %s33 = sadd.s32 1, %s26
      %p34 = scmp.ge.s32.totalorder %s33, 1
      %s35 = scalar_select %p34, 0, %s33
      %s36 = sadd.s32 1, %s25
      %s37 = scalar_select %p34, %s36, %s25
      %p38 = scmp.ge.s32.totalorder %s37, 2
      %s39 = scalar_select %p38, 0, %s37
      %s40 = sadd.s32 1, %s24
      %s41 = scalar_select %p38, %s40, %s24
      %p42 = scmp.ge.s32.totalorder %s41, 3
      %s43 = scalar_select %p42, 0, %s41
      %s44 = smul.u32 %s25, 3
      %s45 = sadd.s32 %s44, %s24
      %s46 = smul.u32 %s39, 3
      %s47 = sadd.s32 %s46, %s43
      %s48 = ssub.s32 %s45, %s47
      %s49 = ssub.s32 %s26, %s35
      %s50 = sor.u32 %s48, %s49
      %p51 = scmp.eq.s32.totalorder %s50, 0
      %s53 = sadd.s32 %s52, 1
      %s54 = scalar_select %p51, %s52, %s53
      %p57 = pneg %p51
      %p58 = scmp.eq.s32.totalorder %s17, 5
      %p59 = por %p57, %p58
      %p60 = scmp.ne.s32.totalorder %s52, %s55
      %p61 = scmp.eq.s32.totalorder %s17, 0
      %p62 = por %p60, %p61
      %p63 = scmp.ne.s32.totalorder %s52, %s55
      %p64 = scmp.eq.s32.totalorder %s22, 5
      %p65 = por %p63, %p64
      %p66 = scmp.ne.s32.totalorder %s55, %s56
      %p67 = scmp.eq.s32.totalorder %s22, 0
      %p68 = por %p66, %p67
      %p69 = scmp.ne.s32.totalorder %s55, %s56
      %p70 = scmp.eq.s32.totalorder %s23, 5
      %p71 = por %p69, %p70
      %p73 = scmp.ne.s32.totalorder %s56, %s72
      %p74 = scmp.eq.s32.totalorder %s23, 0
      %p75 = por %p73, %p74
      %s76 = smul.u32 %s25, 3
      %s77 = sadd.s32 %s76, %s24
      %s78 = smul.u32 %s39, 3
      %s79 = sadd.s32 %s78, %s43
      %s80 = ssub.s32 %s77, %s79
      %s81 = ssub.s32 %s26, %s35
      %s82 = sor.u32 %s80, %s81
      %p83 = scmp.eq.s32.totalorder %s82, 0
      %s85 = sadd.s32 %s84, 1
      %s86 = scalar_select %p83, %s84, %s85
      %p89 = pneg %p83
      %p90 = scmp.eq.s32.totalorder %s17, 5
      %p91 = por %p89, %p90
      %p92 = scmp.ne.s32.totalorder %s84, %s87
      %p93 = scmp.eq.s32.totalorder %s17, 0
      %p94 = por %p92, %p93
      %p95 = scmp.ne.s32.totalorder %s84, %s87
      %p96 = scmp.eq.s32.totalorder %s22, 5
      %p97 = por %p95, %p96
      %p98 = scmp.ne.s32.totalorder %s87, %s88
      %p99 = scmp.eq.s32.totalorder %s22, 0
      %p100 = por %p98, %p99
      %p101 = scmp.ne.s32.totalorder %s87, %s88
      %p102 = scmp.eq.s32.totalorder %s23, 5
      %p103 = por %p101, %p102
      %p105 = scmp.ne.s32.totalorder %s88, %s104
      %p106 = scmp.eq.s32.totalorder %s23, 0
      %p107 = por %p105, %p106
      %s108 = ssub.s32 %s24, %s43
      %s109 = ssub.s32 %s25, %s39
      %s110 = sor.u32 %s108, %s109
      %p111 = scmp.eq.s32.totalorder %s110, 0
      %s113 = sadd.s32 %s112, 1
      %s114 = scalar_select %p111, %s112, %s113
      %p117 = pneg %p111
      %p118 = scmp.eq.s32.totalorder %s17, 5
      %p119 = por %p117, %p118
      %p120 = scmp.ne.s32.totalorder %s112, %s115
      %p121 = scmp.eq.s32.totalorder %s17, 0
      %p122 = por %p120, %p121
      %p123 = scmp.ne.s32.totalorder %s112, %s115
      %p124 = scmp.eq.s32.totalorder %s22, 5
      %p125 = por %p123, %p124
      %p126 = scmp.ne.s32.totalorder %s115, %s116
      %p127 = scmp.eq.s32.totalorder %s22, 0
      %p128 = por %p126, %p127
      %p129 = scmp.ne.s32.totalorder %s115, %s116
      %p130 = scmp.eq.s32.totalorder %s23, 5
      %p131 = por %p129, %p130
      %p133 = scmp.ne.s32.totalorder %s116, %s132
      %p134 = scmp.eq.s32.totalorder %s23, 0
      %p135 = por %p133, %p134
      %p136 = scmp.le.s32.totalorder 1, %s17
      %p137 = scmp.lt.s32.totalorder %s17, 7
      %p138 = pnand %p136, %p137
      %p139 = pneg %p138
      // Predicated region
      $region9: #{tpu_custom_call.1} parent=5 // pred_check
        _
      $region10: #{tpu_custom_call.1} parent=5 // pred_check_branch
        %141 = sbr.rel (%p138) target = $region12
      $region11: #{tpu_custom_call.1} parent=5 // pred_region
        %s142 = ssub.s32 %s17, 1
      $region12: #{tpu_custom_call.1} parent=5 // pred_fallthru
        _
      %p143 = scmp.lt.s32.totalorder %s17, 6
      // Predicated region
      $region13: #{tpu_custom_call.1} parent=5 // pred_check
        %p144 = pneg %p143
      $region14: #{tpu_custom_call.1} parent=5 // pred_check_branch
        %146 = sbr.rel (%p144) target = $region16
      $region15: #{tpu_custom_call.1} parent=5 // pred_region
        // Predicated region
        $region17: #{tpu_custom_call.1} parent=15 // pred_check
          %p147 = pneg %p62
        $region18: #{tpu_custom_call.1} parent=15 // pred_check_branch
          %149 = sbr.rel (%p147) target = $region20
        $region19: #{tpu_custom_call.1} parent=15 // pred_region
          %s150 = sand.u32 %s52, 1
          %s151 = scalar_lea.sflag [#allocation3], %s150
          %s152 = sand.u32 %s52, 1
          %s153 = smul.addr %s152, 8
          %s154 = scalar_lea.vmem [#allocation2], %s153
          %s155 = smul.u32 %s25, 3
          %s156 = sadd.s32 %s155, %s24
          %s158 = ssub.s32 128, 128
          %159 = vsyncadd %s151, %s158
          %s160 = sadd.s32 %s26, %s156
          %s161 = smul.addr %s160, 128
          %s162 = scalar_lea.hbm %s0, %s161
          %s164 = sshll.u32 %s154, 4
          %s165 = int_to_ptr.vmem [resolvable:$true] %s164
          %167 = dma.hbm_to_vmem [thread:$0]  %s162, 128, %s165, %s151
        $region20: #{tpu_custom_call.1} parent=15 // pred_fallthru
          _
        // Predicated region
        $region21: #{tpu_custom_call.1} parent=15 // pred_check
          %p168 = pneg %p94
        $region22: #{tpu_custom_call.1} parent=15 // pred_check_branch
          %170 = sbr.rel (%p168) target = $region24
        $region23: #{tpu_custom_call.1} parent=15 // pred_region
          %s171 = sand.u32 %s84, 1
          %s172 = scalar_lea.sflag [#allocation6], %s171
          %s173 = sand.u32 %s84, 1
          %s174 = smul.addr %s173, 8
          %s175 = scalar_lea.vmem [#allocation5], %s174
          %s176 = smul.u32 %s25, 3
          %s177 = sadd.s32 %s176, %s24
          %s179 = ssub.s32 128, 128
          %180 = vsyncadd %s172, %s179
          %s181 = sadd.s32 %s26, %s177
          %s182 = smul.addr %s181, 128
          %s183 = scalar_lea.hbm %s1, %s182
          %s185 = sshll.u32 %s175, 4
          %s186 = int_to_ptr.vmem [resolvable:$true] %s185
          %188 = dma.hbm_to_vmem [thread:$0]  %s183, 128, %s186, %s172
        $region24: #{tpu_custom_call.1} parent=15 // pred_fallthru
          _
      $region16: #{tpu_custom_call.1} parent=5 // pred_fallthru
        _
      %p189 = scmp.le.s32.totalorder 1, %s17
      %p190 = scmp.lt.s32.totalorder %s17, 7
      %p191 = pnand %p189, %p190
      %p192 = pneg %p191
      // Predicated region
      $region25: #{tpu_custom_call.1} parent=5 // pred_check
        _
      $region26: #{tpu_custom_call.1} parent=5 // pred_check_branch
        %194 = sbr.rel (%p191) target = $region28
      $region27: #{tpu_custom_call.1} parent=5 // pred_region
        %s195 = ssub.s32 %s17, 1
        %s196 = sand.u32 %s55, 1
        %s197 = scalar_lea.sflag [#allocation3], %s196
        %s198 = sand.u32 %s55, 1
        %s199 = smul.addr %s198, 8
        %s200 = scalar_lea.vmem [#allocation2], %s199
        // Predicated region
        $region29: #{tpu_custom_call.1} parent=27 // pred_check
          %p201 = pneg %p68
        $region30: #{tpu_custom_call.1} parent=27 // pred_check_branch
          %203 = sbr.rel (%p201) target = $region32
        $region31: #{tpu_custom_call.1} parent=27 // pred_region
          %204 = dma.done %s197, 128
        $region32: #{tpu_custom_call.1} parent=27 // pred_fallthru
          _
        %s205 = sand.u32 %s87, 1
        %s206 = scalar_lea.sflag [#allocation6], %s205
        %s207 = sand.u32 %s87, 1
        %s208 = smul.addr %s207, 8
        %s209 = scalar_lea.vmem [#allocation5], %s208
        // Predicated region
        $region33: #{tpu_custom_call.1} parent=27 // pred_check
          %p210 = pneg %p100
        $region34: #{tpu_custom_call.1} parent=27 // pred_check_branch
          %212 = sbr.rel (%p210) target = $region36
        $region35: #{tpu_custom_call.1} parent=27 // pred_region
          %213 = dma.done %s206, 128
        $region36: #{tpu_custom_call.1} parent=27 // pred_fallthru
          _
        %s214 = sand.u32 %s55, 1
        %s215 = scalar_lea.sflag [#allocation3], %s214
        %s216 = sand.u32 %s55, 1
        %s217 = smul.addr %s216, 8
        %s218 = scalar_lea.vmem [#allocation2], %s217
        %p219 = pneg %p68
        %p220 = pneg %p65
        %s221 = sand.u32 %s87, 1
        %s222 = scalar_lea.sflag [#allocation6], %s221
        %s223 = sand.u32 %s87, 1
        %s224 = smul.addr %s223, 8
        %s225 = scalar_lea.vmem [#allocation5], %s224
        %p226 = pneg %p100
        %p227 = pneg %p97
        %p228 = pneg %p128
        %p229 = pneg %p125
        %s230 = sand.u32 %s115, 1
        %s231 = scalar_lea.sflag [#allocation4], %s230
        %s232 = sand.u32 %s115, 1
        %s233 = smul.addr %s232, 24
        %s234 = scalar_lea.vmem [#allocation7], %s233
        %s235 = smul.u32 %s28, 3
        %s236 = sadd.s32 %s235, %s27
        %s237 = smul.u32 %s28, 3
        %s238 = sadd.s32 %s237, %s27
        %p239 = scmp.eq.s32.totalorder %s29, 0
        // Predicated region
        $region37: #{tpu_custom_call.1} parent=27 // pred_check
          %p240 = pneg %p239
        $region38: #{tpu_custom_call.1} parent=27 // pred_check_branch
          %242 = sbr.rel (%p240) target = $region40
        $region39: #{tpu_custom_call.1} parent=27 // pred_region
          %243 = vst [vmem:[%s234] sm:$0xff] 0.0
          %244 = vst [vmem:[%s234 + $0x8] sm:$0xff] 0.0
          %245 = vst [vmem:[%s234 + $0x10] sm:$0xff] 0.0
        $region40: #{tpu_custom_call.1} parent=27 // pred_fallthru
          _
        %v246 = vld [vmem:[%s200] sm:$0xff]
        %v247 = vld [vmem:[%s209] sm:$0xff]
        %v248 = vxor.u32 %v246, 2147483648
        %v249 = vmul.f32 %v248, 1.442695
        %v250 = vpow.pop %v249
        %v251 = vadd.f32 %v250, 1.0
        %v252 = vrcp.pop %v251
        %v253 = vmul.f32 1.0, %v252
        %v254 = vld [vmem:[%s234] sm:$0xff]
        %v255 = vmul.f32 %v253, %v247
        %v256 = vadd.f32 %v255, 0.0
        %v257 = vadd.f32 %v254, %v256
        %258 = vst [vmem:[%s234] sm:$0xff] %v257
        %s259 = scalar_lea.vmem %s234, 8 [#allocation7]
        %v260 = vld [vmem:[%s259] sm:$0xff]
        %v261 = vmul.f32 %v253, %v253
        %v262 = vadd.f32 %v261, 0.0
        %v263 = vadd.f32 %v260, %v262
        %264 = vst [vmem:[%s259] sm:$0xff] %v263
        %s265 = scalar_lea.vmem %s234, 16 [#allocation7]
        %v266 = vld [vmem:[%s265] sm:$0xff]
        %v267 = vmul.f32 %v247, %v247
        %v268 = vadd.f32 %v267, 0.0
        %v269 = vadd.f32 %v266, %v268
        %270 = vst [vmem:[%s265] sm:$0xff] %v269
        %s271 = sand.u32 %s115, 1
        %s272 = scalar_lea.sflag [#allocation4], %s271
        %s273 = sand.u32 %s115, 1
        %s274 = smul.addr %s273, 24
        %s275 = scalar_lea.vmem [#allocation7], %s274
        // Predicated region
        $region41: #{tpu_custom_call.1} parent=27 // pred_check
          %p276 = pneg %p125
        $region42: #{tpu_custom_call.1} parent=27 // pred_check_branch
          %278 = sbr.rel (%p276) target = $region44
        $region43: #{tpu_custom_call.1} parent=27 // pred_region
          %s280 = ssub.s32 384, 384
          %281 = vsyncadd %s272, %s280
          %s282 = smul.addr %s28, 3
          %s283 = smul.addr %s27, 6
          %s284 = sadd.s32 %s282, %s283
          %s285 = smul.addr %s284, 128
          %s286 = scalar_lea.hbm %s2, %s285
          %s287 = sshll.u32 %s275, 4
          %s288 = int_to_ptr.vmem [resolvable:$true] %s287
          %293 = dma.vmem_to_hbm [thread:$0]  %s288, 384, %s286, %s272, 128, 128, 8
        $region44: #{tpu_custom_call.1} parent=27 // pred_fallthru
          _
      $region28: #{tpu_custom_call.1} parent=5 // pred_fallthru
        _
      %p294 = scmp.le.s32.totalorder 2, %s17
      // Predicated region
      $region45: #{tpu_custom_call.1} parent=5 // pred_check
        %p295 = pneg %p294
      $region46: #{tpu_custom_call.1} parent=5 // pred_check_branch
        %297 = sbr.rel (%p295) target = $region48
      $region47: #{tpu_custom_call.1} parent=5 // pred_region
        %s298 = ssub.s32 %s17, 2
        // Predicated region
        $region49: #{tpu_custom_call.1} parent=47 // pred_check
          %p299 = pneg %p131
        $region50: #{tpu_custom_call.1} parent=47 // pred_check_branch
          %301 = sbr.rel (%p299) target = $region52
        $region51: #{tpu_custom_call.1} parent=47 // pred_region
          %s302 = sand.u32 %s116, 1
          %s303 = scalar_lea.sflag [#allocation4], %s302
          %s304 = sand.u32 %s116, 1
          %s305 = smul.addr %s304, 24
          %s306 = scalar_lea.vmem [#allocation7], %s305
          %307 = dma.done %s303, 384
        $region52: #{tpu_custom_call.1} parent=47 // pred_fallthru
          _
      $region48: #{tpu_custom_call.1} parent=5 // pred_fallthru
        _
    $region6: #{tpu_custom_call.1} parent=1 // loop_footer
      %s21 = sadd.s32 1, %s17
    $region7: #{tpu_custom_call.1} parent=1 // loop_footer_branch
      %16 = sbr.rel target = $region3
    $region8: #{tpu_custom_call.1} parent=1 // loop_exit
      _
    %308 = vsyncpa [#allocation3], 1
    %s309 = scalar_lea.sflag [#allocation3], 1
    %310 = vsyncpa %s309, 1
    %311 = vsyncpa [#allocation6], 1
    %s312 = scalar_lea.sflag [#allocation6], 1
    %313 = vsyncpa %s312, 1
    %314 = vsyncpa [#allocation4], 1
    %s315 = scalar_lea.sflag [#allocation4], 1
    %316 = vsyncpa %s315, 1

</llo_original>
